<compile_context>
chip_gen: v6e
topology: v6e:2x2x1
jax: 0.10.0
libtpu: 0.0.40
codegen_flags: <defaults>
</compile_context>

<pallas_src>
import functools

import jax
import jax.numpy as jnp
from jax import lax
from jax.experimental import pallas as pl
from jax.experimental.pallas import tpu as pltpu


def _ls_ce_kernel(x_ref, t_ref, out_ref, *, smoothing, n_valid):
    i = pl.program_id(0)
    x = x_ref[...].astype(jnp.float32)                              # (TN, C)
    t = t_ref[...]                                                  # (TN, 1) int32
    tn, c = x.shape

    # Fused label-smoothing CE with the row max cancelled analytically:
    #   loss = log(sum_j exp(x_j - m)) - (s/C) * sum_j (x_j - m)
    #          - (1 - s) * (x_target - m)
    m = jnp.max(x, axis=-1, keepdims=True)                          # (TN, 1)
    xm = x - m                                                      # (TN, C)
    lse = jnp.log(jnp.sum(jnp.exp(xm), axis=-1, keepdims=True))     # (TN, 1)
    sum_xm = jnp.sum(xm, axis=-1, keepdims=True)                    # (TN, 1)

    class_ids = lax.broadcasted_iota(jnp.int32, (1, c), 1)          # (1, C), cheap
    xm_t = jnp.sum(jnp.where(class_ids == t, xm, 0.0),
                   axis=-1, keepdims=True)                          # (TN, 1)

    row_loss = lse - (smoothing / c) * sum_xm - (1.0 - smoothing) * xm_t

    # Mask rows past the true N (ragged last tile reads unspecified data).
    row_ids = i * tn + lax.broadcasted_iota(jnp.int32, (tn, 1), 0)  # (TN, 1)
    row_loss = jnp.where(row_ids < n_valid, row_loss, 0.0)

    tile_sum = jnp.sum(row_loss, axis=0, keepdims=True)             # (1, 1)
    out_ref[...] = jnp.broadcast_to(tile_sum, (1, 128)).astype(out_ref.dtype)


def label_smoothing_cross_entropy(x, target, smoothing=0.1):
    """x: (N, C) float (f32 or bf16), target: (N,) int. Returns scalar f32 mean loss."""
    assert smoothing < 1.0
    n, c = x.shape
    itemsize = jnp.dtype(x.dtype).itemsize
    sublane = 16 if itemsize < 4 else 8          # bf16 packs 2 rows per sublane

    # Generation-aware VMEM budgets (block budget is in f32-equivalent bytes,
    # since in-kernel math upcasts to f32).
    try:
        vmem_cap = int(getattr(pltpu.get_tpu_info(), "vmem_capacity_bytes", 0))
    except Exception:  # pragma: no cover - conservative fallback
        vmem_cap = 0
    if vmem_cap >= 96 * 2**20:                   # v5e / v6e: 128 MiB VMEM
        f32_block_budget = 6 * 2**20
        vmem_limit = 56 * 2**20
    else:                                        # v7x (64 MiB / TC) or unknown
        f32_block_budget = 3 * 2**20
        vmem_limit = 34 * 2**20

    # Largest sublane-aligned row tile under the block budget; hard cap keeps
    # the per-row (TN, 1) f32 temporaries tiny for small C.
    tile_n = f32_block_budget // (4 * max(1, c))
    tile_n = min(tile_n, 8192)
    tile_n = max(sublane, (tile_n // sublane) * sublane)

    # Keep at least two grid tiles when N allows it (v7x has 2 TensorCores).
    if n > sublane:
        tile_n = min(tile_n, sublane * pl.cdiv(n, 2 * sublane))
    n_ceil = ((n + sublane - 1) // sublane) * sublane
    tile_n = min(tile_n, n_ceil)

    num_tiles = pl.cdiv(n, tile_n)
    n_pad = num_tiles * tile_n

    # Only the tiny target vector is padded; logits are never copied/padded.
    t2d = target.astype(jnp.int32).reshape(n, 1)
    if n_pad != n:
        t2d = jnp.pad(t2d, ((0, n_pad - n), (0, 0)))

    kernel = functools.partial(_ls_ce_kernel, smoothing=float(smoothing),
                               n_valid=n)

    tile_sums = pl.pallas_call(
        kernel,
        out_shape=jax.ShapeDtypeStruct((num_tiles, 128), jnp.float32),
        grid_spec=pltpu.PrefetchScalarGridSpec(
            num_scalar_prefetch=0,
            grid=(num_tiles,),
            in_specs=[
                pl.BlockSpec((tile_n, c), lambda i: (i, 0)),
                pl.BlockSpec((tile_n, 1), lambda i: (i, 0)),
            ],
            out_specs=pl.BlockSpec((1, 128), lambda i: (i, 0)),
        ),
        compiler_params=pltpu.CompilerParams(
            dimension_semantics=("parallel",),
            vmem_limit_bytes=int(vmem_limit),
        ),
        cost_estimate=pl.CostEstimate(
            flops=int(10 * n * c),
            transcendentals=int(n * c),
            bytes_accessed=int(n * c * itemsize + n_pad * 4 + num_tiles * 512),
        ),
    )(x, t2d)

    # Tiny final reduction (mean over the N valid rows) in plain XLA.
    return jnp.sum(tile_sums[:, 0]) / jnp.float32(n)


def _reference(x, target, smoothing=0.1):
    logprobs = jax.nn.log_softmax(x.astype(jnp.float32), axis=-1)
    nll = -jnp.take_along_axis(logprobs, target[:, None], axis=-1)[:, 0]
    smooth = -jnp.mean(logprobs, axis=-1)
    loss = (1.0 - smoothing) * nll + smoothing * smooth
    return jnp.mean(loss)


if __name__ == "__main__":
    key = jax.random.PRNGKey(0)
    k1, k2, k3, k4, k5, k6 = jax.random.split(key, 6)

    # Case 1: small, single tile (block == full array).
    N1, C1 = 8, 32
    x1 = jax.random.normal(k1, (N1, C1), dtype=jnp.float32)
    t1 = jax.random.randint(k2, (N1,), 0, C1, dtype=jnp.int32)
    loss1 = jax.block_until_ready(label_smoothing_cross_entropy(x1, t1, 0.1))
    ref1 = _reference(x1, t1, 0.1)
    assert jnp.allclose(loss1, ref1, atol=1e-5, rtol=1e-5), (loss1, ref1)

    # Case 2: ragged N (exercises the partial last block + in-kernel row mask).
    N2, C2 = 10, 48
    x2 = jax.random.normal(k3, (N2, C2), dtype=jnp.float32)
    t2 = jax.random.randint(k4, (N2,), 0, C2, dtype=jnp.int32)
    loss2 = jax.block_until_ready(label_smoothing_cross_entropy(x2, t2, 0.1))
    ref2 = _reference(x2, t2, 0.1)
    assert jnp.allclose(loss2, ref2, atol=1e-5, rtol=1e-5), (loss2, ref2)

    # Case 3: multiple tiles with a ragged final tile.
    N3, C3 = 50, 40
    x3 = jax.random.normal(k5, (N3, C3), dtype=jnp.float32)
    t3 = jax.random.randint(k6, (N3,), 0, C3, dtype=jnp.int32)
    loss3 = jax.block_until_ready(label_smoothing_cross_entropy(x3, t3, 0.1))
    ref3 = _reference(x3, t3, 0.1)
    assert jnp.allclose(loss3, ref3, atol=1e-5, rtol=1e-5), (loss3, ref3)

    print("KERNEL_OK")
</pallas_src>

<mosaic_0001>
module attributes {stable_mosaic.version = 11 : i64} {
  func.func @_ls_ce_kernel(%arg0: i32, %arg1: memref<8x32xf32, #tpu.memory_space<vmem>>, %arg2: memref<8x1xi32, #tpu.memory_space<vmem>>, %arg3: memref<1x128xf32, #tpu.memory_space<vmem>>) attributes {dimension_semantics = [#tpu.dimension_semantics<parallel>], iteration_bounds = array<i64: 1>, scalar_prefetch = 0 : i64, scratch_operands = 0 : i64, tpu.core_type = #tpu.core_type<tc>, window_params = [{transform_indices = @transform_0, window_bounds = array<i64: 8, 32>}, {transform_indices = @transform_1, window_bounds = array<i64: 8, 1>}, {transform_indices = @transform_2, window_bounds = array<i64: 1, 128>}]} {
    %c0 = arith.constant 0 : index
    %c0_0 = arith.constant 0 : index
    %0 = vector.load %arg1[%c0, %c0_0] : memref<8x32xf32, #tpu.memory_space<vmem>>, vector<8x32xf32>
    %c0_1 = arith.constant 0 : index
    %c0_2 = arith.constant 0 : index
    %1 = vector.load %arg2[%c0_1, %c0_2] : memref<8x1xi32, #tpu.memory_space<vmem>>, vector<8x1xi32>
    %cst = arith.constant dense<0xFF800000> : vector<8xf32>
    %2 = vector.multi_reduction <maximumf>, %0, %cst [1] : vector<8x32xf32> to vector<8xf32>
    %3 = vector.shape_cast %2 : vector<8xf32> to vector<8x1xf32>
    %4 = vector.broadcast %3 : vector<8x1xf32> to vector<8x32xf32>
    %5 = arith.subf %0, %4 : vector<8x32xf32>
    %6 = math.exp %5 : vector<8x32xf32>
    %cst_3 = arith.constant dense<0.000000e+00> : vector<8xf32>
    %7 = vector.multi_reduction <add>, %6, %cst_3 [1] : vector<8x32xf32> to vector<8xf32>
    %8 = vector.shape_cast %7 : vector<8xf32> to vector<8x1xf32>
    %9 = math.log %8 : vector<8x1xf32>
    %cst_4 = arith.constant dense<0.000000e+00> : vector<8xf32>
    %10 = vector.multi_reduction <add>, %5, %cst_4 [1] : vector<8x32xf32> to vector<8xf32>
    %11 = vector.shape_cast %10 : vector<8xf32> to vector<8x1xf32>
    %12 = tpu.iota {dimensions = array<i32: 1>} : vector<1x32xi32>
    %13 = vector.broadcast %12 : vector<1x32xi32> to vector<8x32xi32>
    %14 = vector.broadcast %1 : vector<8x1xi32> to vector<8x32xi32>
    %15 = arith.cmpi eq, %13, %14 : vector<8x32xi32>
    %cst_5 = arith.constant 0.000000e+00 : f32
    %16 = vector.broadcast %cst_5 : f32 to vector<8x32xf32>
    %17 = arith.select %15, %5, %16 : vector<8x32xi1>, vector<8x32xf32>
    %cst_6 = arith.constant dense<0.000000e+00> : vector<8xf32>
    %18 = vector.multi_reduction <add>, %17, %cst_6 [1] : vector<8x32xf32> to vector<8xf32>
    %19 = vector.shape_cast %18 : vector<8xf32> to vector<8x1xf32>
    %cst_7 = arith.constant 3.125000e-03 : f32
    %20 = vector.broadcast %cst_7 : f32 to vector<8x1xf32>
    %21 = arith.mulf %20, %11 : vector<8x1xf32>
    %22 = arith.subf %9, %21 : vector<8x1xf32>
    %cst_8 = arith.constant 0.899999976 : f32
    %23 = vector.broadcast %cst_8 : f32 to vector<8x1xf32>
    %24 = arith.mulf %23, %19 : vector<8x1xf32>
    %25 = arith.subf %22, %24 : vector<8x1xf32>
    %c8_i32 = arith.constant 8 : i32
    %26 = arith.muli %arg0, %c8_i32 : i32
    %27 = tpu.iota {dimensions = array<i32: 0>} : vector<8x1xi32>
    %28 = vector.broadcast %26 : i32 to vector<8x1xi32>
    %29 = arith.addi %28, %27 : vector<8x1xi32>
    %c8_i32_9 = arith.constant 8 : i32
    %30 = vector.broadcast %c8_i32_9 : i32 to vector<8x1xi32>
    %31 = arith.cmpi slt, %29, %30 : vector<8x1xi32>
    %cst_10 = arith.constant 0.000000e+00 : f32
    %32 = vector.broadcast %cst_10 : f32 to vector<8x1xf32>
    %33 = arith.select %31, %25, %32 : vector<8x1xi1>, vector<8x1xf32>
    %cst_11 = arith.constant dense<0.000000e+00> : vector<1xf32>
    %34 = vector.multi_reduction <add>, %33, %cst_11 [0] : vector<8x1xf32> to vector<1xf32>
    %35 = vector.shape_cast %34 : vector<1xf32> to vector<1x1xf32>
    %36 = vector.shape_cast %35 : vector<1x1xf32> to vector<1x1xf32>
    %37 = vector.broadcast %36 : vector<1x1xf32> to vector<1x128xf32>
    %c0_12 = arith.constant 0 : index
    %c0_13 = arith.constant 0 : index
    %38 = vector.load %arg3[%c0_12, %c0_13] : memref<1x128xf32, #tpu.memory_space<vmem>>, vector<1x128xf32>
    tpu.vector_store %arg3[%c0_12, %c0_13], %37 {strides = array<i32>} : memref<1x128xf32, #tpu.memory_space<vmem>>, vector<1x128xf32>,
    return
  }
  func.func @transform_0(%arg0: i32) -> (i32, i32) {
    %c0_i32 = arith.constant 0 : i32
    %c0_i32_0 = arith.constant 0 : i32
    return %arg0, %c0_i32 : i32, i32
  }
  func.func @transform_1(%arg0: i32) -> (i32, i32) {
    %c0_i32 = arith.constant 0 : i32
    %c0_i32_0 = arith.constant 0 : i32
    return %arg0, %c0_i32 : i32, i32
  }
  func.func @transform_2(%arg0: i32) -> (i32, i32) {
    %c0_i32 = arith.constant 0 : i32
    %c0_i32_0 = arith.constant 0 : i32
    return %arg0, %c0_i32 : i32, i32
  }
}

</mosaic_0001>

<llo_original>
// kernel: tpu_custom_call.1
$region0: #{tpu_custom_call.1}
  #allocation0 [shape = 'u32[]', space=smem, size = 0x4, offset = 0x4, fixed_abs, tag = 'smem constant byte address 0x4 - core index']
  #allocation1 [shape = 'u32[144,128]{1,0:T(1,128)}', space=vmem, size = 0x12000, scoped, tag = 'internal scratch']
  %s0 = inlined_call_operand.vmem [shape: f32[8,32], index: 0, kind: input, shape index: {}]
  %s1 = inlined_call_operand.vmem [shape: s32[8,1], index: 1, kind: input, shape index: {}]
  %s2 = inlined_call_operand.hbm [shape: f32[1,128], index: 2, kind: output, shape index: {}]
  %s3 = sld [smem:[#allocation0]]
  $region18: #{tpu_custom_call.1} parent=0
    _
  %s5 = ssub.s32 1, %s3
  %s6 = scalar_select 0, %s5, %s3
  $region1: #{tpu_custom_call.1} parent=0
    #allocation2 [shape = 'u8[512]{0}', space=vmem, size = 0x400, scoped, tag = 'output window, operand 0, single buffered']
    #allocation3 [shape = 's32[1]{0}', space=sflag, size = 0x4, scoped, tag = 'scoped memory for tpu_custom_call.1']
    %7 = vsyncpa [#allocation3], 0
    // Predicated region
    $region2: #{tpu_custom_call.1} parent=1 // pred_check
      _
    $region3: #{tpu_custom_call.1} parent=1 // pred_check_branch
      %9 = sbr.rel (0) target = $region5
    $region4: #{tpu_custom_call.1} parent=1 // pred_region
      _
    $region5: #{tpu_custom_call.1} parent=1 // pred_fallthru
      _
    // Predicated region
    $region6: #{tpu_custom_call.1} parent=1 // pred_check
      _
    $region7: #{tpu_custom_call.1} parent=1 // pred_check_branch
      %11 = sbr.rel (0) target = $region9
    $region8: #{tpu_custom_call.1} parent=1 // pred_region
      _
    $region9: #{tpu_custom_call.1} parent=1 // pred_fallthru
      _
    %v12 = vld [vmem:[%s0] sm:$0xff]
    %v13 = vld [vmem:[%s1] sm:$0xff]
    %vm14 = vcmask 261120
    %v15 = vsel %vm14, %v12, -inf
    %16 = vmax.xlane.f32.xlu0 %v15
    %v17 = vpop.xlane.xlu0 %16
    %v18 = vsub.f32 %v12, %v17
    %v19 = vmul.f32 %v18, 1.442695
    %v20 = vpow.pop %v19
    %v21 = vsel %vm14, %v20, 0.0
    %22 = vadd.xlane.f32.xlu0 %v21
    %v23 = vpop.xlane.xlu0 %22
    %v24 = vlog2.pop %v23
    %v25 = vmul.f32 %v24, 0.6931472
    %v26 = vsel %vm14, %v18, 0.0
    %27 = vadd.xlane.f32.xlu0 %v26
    %v28 = vpop.xlane.xlu0 %27
    %v29 = vlaneseq
    %v30 = vand.u32 %v29, 127
    %31 = vset.pattern.permute.xlu0 0
    %32 = vperm.xlu0 %31, %v13
    %v33 = vpop.permute.xlu0 %32
    %vm34 = vcmp.eq.s32.totalorder %v30, %v33
    %v35 = vsel %vm34, %v18, 0.0
    %v36 = vsel %vm14, %v35, 0.0
    %37 = vadd.xlane.f32.xlu0 %v36
    %v38 = vpop.xlane.xlu0 %37
    %v39 = vmul.f32 %v28, 0.003125
    %v40 = vsub.f32 %v25, %v39
    %v41 = vmul.f32 %v38, 0.9
    %v42 = vsub.f32 %v40, %v41
    %s43 = smul.u32 0, 8
    %v44 = vlaneseq
    %v45 = vshrl.u32 %v44, 7
    %v46 = vstv %s43
    %v47 = vadd.s32 %v46, %v45
    %vm48 = vcmp.lt.s32.totalorder %v47, 8
    %v49 = vsel %vm48, %v42, 0.0
    %v50 = vrot.slane %v49, 4
    %v51 = vadd.f32 %v49, %v50
    %v52 = vrot.slane %v51, 2
    %v53 = vadd.f32 %v51, %v52
    %v54 = vrot.slane %v53, 1
    %v55 = vadd.f32 %v53, %v54
    %56 = vst [vmem:[#allocation2] sm:$0x1] %v55
    // Predicated region
    $region10: #{tpu_custom_call.1} parent=1 // pred_check
      _
    $region11: #{tpu_custom_call.1} parent=1 // pred_check_branch
      %58 = sbr.rel (0) target = $region13
    $region12: #{tpu_custom_call.1} parent=1 // pred_region
      %s60 = ssub.s32 16, 16
      %61 = vsyncadd [#allocation3], %s60
      %s63 = sshll.u32 [#allocation2], 4
      %s64 = int_to_ptr.vmem [resolvable:$true] %s63
      %66 = dma.vmem_to_hbm [thread:$0]  %s64, 16, %s2, [#allocation3]
    $region13: #{tpu_custom_call.1} parent=1 // pred_fallthru
      _
    // Predicated region
    $region14: #{tpu_custom_call.1} parent=1 // pred_check
      _
    $region15: #{tpu_custom_call.1} parent=1 // pred_check_branch
      %68 = sbr.rel (0) target = $region17
    $region16: #{tpu_custom_call.1} parent=1 // pred_region
      %69 = dma.done [#allocation3], 16
    $region17: #{tpu_custom_call.1} parent=1 // pred_fallthru
      _
    %70 = vsyncpa [#allocation3], 1

</llo_original>
